<compile_context>
chip_gen: v7x
topology: tpu7x:2x2x1
jax: 0.10.0
libtpu: 0.0.40
codegen_flags: <defaults>
</compile_context>

<pallas_src>
from math import sqrt

import jax
import jax.numpy as jnp
from jax import lax
from jax.experimental import pallas as pl
from jax.experimental.pallas import tpu as pltpu

# ---------------- problem sizes (small, consistent with the module) ------------
B = 2          # batch
CIN = 4        # in_channel
COUT = 8       # out_channel
H = W = 16     # spatial
K = 3          # kernel_size
STYLE_DIM = 32 # style_dim (512 in the original; shrunk for the synthetic test)
EPS = 1e-5     # BatchNorm2d eps

HP, WP = H + 2, W + 2      # zero-padded spatial extents (pad=1)
QL = H * WP                # 288: valid lanes per batch slot (H rows x padded width WP)
QS = 384                   # per-batch lane slot, padded to a multiple of 128
NTOT = B * QS              # 768: output lane extent (batch folded into lanes)
QPAD = 512                 # padded-input lane extent >= max tap offset (2*WP+2) + QS = 422
KKC = K * K * CIN          # 36: packed contraction depth (9 taps x CIN)


def _styled_conv_kernel(x_ref, w_ref, lat_ref, fcw_ref, fcb_ref, out_ref, rhs_ref):
    """Single-program kernel (everything fits trivially in VMEM).

    x_ref   : [B, CIN, QPAD]      f32  zero-padded input, padded spatial flattened to lanes
    w_ref   : [COUT, KKC]         f32  conv weight packed per-tap (EqualLR scale folded)
    lat_ref : [B, STYLE_DIM]      f32  latent
    fcw_ref : [2*COUT, STYLE_DIM] f32  style FC weight (lr-mul = 1 folded)
    fcb_ref : [2*COUT, 1]         f32  style FC bias
    out_ref : [COUT, NTOT]        f32  output, batch folded into lanes (junk lanes stripped
                                       by the wrapper)
    rhs_ref : [KKC, NTOT]         f32  VMEM scratch: packed im2col RHS
    """
    # ---- pack im2col RHS: 9 statically-offset lane slices per batch, full-width writes ----
    for t in range(K * K):
        off = (t // K) * WP + (t % K)                   # static lane offset of this tap
        for b in range(B):
            rhs_ref[t * CIN:(t + 1) * CIN, b * QS:(b + 1) * QS] = x_ref[b, :, off:off + QS]

    # ---- EqualConv2d (3x3, pad=1) as ONE MXU contraction: [COUT,36] @ [36, B*QS] ----
    acc = jnp.dot(w_ref[...], rhs_ref[...], preferred_element_type=jnp.float32)  # [COUT, NTOT]
    # Conv bias intentionally omitted: a per-channel constant cancels exactly through
    # training-mode BatchNorm (and EqualConv2d zero-initializes it).

    # ---- BatchNorm2d stats (training mode, biased var) in one masked pass ----
    # Lanes with (q mod WP) >= W are row-wrap junk; lanes >= QL in each batch slot are pad
    # (exactly zero, but masked anyway).  Neither is read back by the wrapper.
    q = lax.broadcasted_iota(jnp.int32, (1, NTOT), 1)
    qq = q % QS
    valid = jnp.logical_and(qq < QL, (qq % WP) < W).astype(jnp.float32)   # [1, NTOT]
    n = float(B * H * W)
    acc_m = acc * valid
    mean = jnp.sum(acc_m, axis=1, keepdims=True) / n                      # [COUT, 1]
    var = jnp.sum(acc_m * acc_m, axis=1, keepdims=True) / n - mean * mean
    inv_std = lax.rsqrt(var + EPS)                                        # [COUT, 1]
    # nn.BatchNorm2d affine params initialize to weight=1, bias=0 -> identity here.

    # ---- ApplyStyle: FC (linear + leaky_relu 0.2) on the VPU, BN folded into the affine ----
    fcw = fcw_ref[...]                                                    # [2*COUT, STYLE_DIM]
    fcb = fcb_ref[...]                                                    # [2*COUT, 1]
    lat = lat_ref[...]                                                    # [B, STYLE_DIM]
    for b in range(B):
        st = jnp.sum(fcw * lat[b:b + 1, :], axis=1, keepdims=True) + fcb  # [2*COUT, 1]
        st = jnp.where(st >= 0.0, st, 0.2 * st)                           # leaky_relu(0.2)
        a = (st[:COUT, :] + 1.0) * inv_std                                # BN scale folded in
        sh = st[COUT:, :] - mean * a                                      # BN mean folded in
        sl = slice(b * QS, (b + 1) * QS)                                  # lane-aligned slot
        out_ref[:, sl] = jnp.maximum(acc[:, sl] * a + sh, 0.0)            # single FMA + ReLU


@jax.jit
def styled_conv_block(x_nchw, latent, conv_w, conv_b, fc_w, fc_b):
    """NCHW in / NCHW out.  Wrapper does only cheap padding/reshape + parameter packing."""
    del conv_b  # exactly cancelled by training-mode BatchNorm (and zero-initialized in the module)

    # EqualLR scaling; weight packed lane-dense as [COUT, (kh*K + kw)*CIN + cin] = [8, 36].
    eqlr = sqrt(2.0 / (CIN * K * K))                                   # sqrt(2 / fan_in)
    w_pk = jnp.transpose(conv_w * eqlr, (0, 2, 3, 1)).reshape(COUT, KKC)

    # FC(use_wscale=False, lrmul=1.0): w_lrmul = b_lrmul = 1.0
    fcb_col = fc_b.reshape(2 * COUT, 1)

    # Zero-pad H and W (pad=1), flatten padded spatial into lanes, pad lanes to QPAD
    # (covers the largest tap offset + a full per-batch slot; extra lanes are zero).
    x_pad = jnp.pad(x_nchw, ((0, 0), (0, 0), (1, 1), (1, 1)))          # [B, CIN, HP, WP]
    x_flat = jnp.pad(x_pad.reshape(B, CIN, HP * WP),
                     ((0, 0), (0, 0), (0, QPAD - HP * WP)))            # [B, CIN, QPAD]

    vmem = pl.BlockSpec(memory_space=pltpu.MemorySpace.VMEM)
    out_q = pl.pallas_call(
        _styled_conv_kernel,
        out_shape=jax.ShapeDtypeStruct((COUT, NTOT), jnp.float32),
        in_specs=[vmem] * 5,
        out_specs=vmem,
        scratch_shapes=[pltpu.VMEM((KKC, NTOT), jnp.float32)],
    )(x_flat, w_pk, latent, fc_w, fcb_col)

    # [COUT, B*QS] -> strip slot padding and the 2 wrap columns per row, then NCHW.
    out = out_q.reshape(COUT, B, QS)[:, :, :QL].reshape(COUT, B, H, WP)[..., :W]
    return jnp.transpose(out, (1, 0, 2, 3))                            # tiny (65 KB) transpose


def _reference(x_nchw, latent, conv_w, conv_b, fc_w, fc_b):
    """Pure-JAX reference mirroring the PyTorch forward (for sanity check)."""
    eqlr_mult = sqrt(2.0 / (CIN * K * K))
    out = lax.conv_general_dilated(
        x_nchw, conv_w * eqlr_mult, window_strides=(1, 1), padding="SAME",
        dimension_numbers=("NCHW", "OIHW", "NCHW")) + conv_b[None, :, None, None]
    mean = out.mean(axis=(0, 2, 3), keepdims=True)
    var = out.var(axis=(0, 2, 3), keepdims=True)            # biased, like PyTorch BN fwd
    out = (out - mean) / jnp.sqrt(var + EPS)
    style = latent @ fc_w.T + fc_b
    style = jnp.where(style >= 0.0, style, 0.2 * style)
    s0 = style[:, :COUT].reshape(B, COUT, 1, 1)
    s1 = style[:, COUT:].reshape(B, COUT, 1, 1)
    out = out * (s0 + 1.0) + s1
    return jnp.maximum(out, 0.0)


if __name__ == "__main__":
    key = jax.random.PRNGKey(0)
    kx, kl, kw, kfc = jax.random.split(key, 4)

    # deterministic inputs
    x = jax.random.normal(kx, (B, CIN, H, W), dtype=jnp.float32)
    latent = jax.random.normal(kl, (B, STYLE_DIM), dtype=jnp.float32)

    # deterministic parameter init (matches the module __init__ distributions)
    conv_w = jax.random.normal(kw, (COUT, CIN, K, K), dtype=jnp.float32)  # .normal_()
    conv_b = jnp.zeros((COUT,), dtype=jnp.float32)                        # bias zero
    fc_init_std = 1.0 * STYLE_DIM ** (-0.5)                               # gain=1, no wscale
    fc_w = jax.random.normal(kfc, (2 * COUT, STYLE_DIM), dtype=jnp.float32) * fc_init_std
    fc_b = jnp.zeros((2 * COUT,), dtype=jnp.float32)

    out = styled_conv_block(x, latent, conv_w, conv_b, fc_w, fc_b)
    out = jax.block_until_ready(out)

    ref = _reference(x, latent, conv_w, conv_b, fc_w, fc_b)
    assert out.shape == (B, COUT, H, W)
    assert jnp.allclose(out, ref, rtol=1e-4, atol=1e-4), "mismatch vs reference"

    print("KERNEL_OK")
</pallas_src>

<mosaic_0001>
module attributes {stable_mosaic.version = 11 : i64} {
  func.func @_styled_conv_kernel(%arg0: memref<2x4x512xf32, #tpu.memory_space<vmem>>, %arg1: memref<8x36xf32, #tpu.memory_space<vmem>>, %arg2: memref<2x32xf32, #tpu.memory_space<vmem>>, %arg3: memref<16x32xf32, #tpu.memory_space<vmem>>, %arg4: memref<16x1xf32, #tpu.memory_space<vmem>>, %arg5: memref<8x768xf32, #tpu.memory_space<vmem>>, %arg6: memref<36x768xf32, #tpu.memory_space<vmem>>) attributes {dimension_semantics = [], scalar_prefetch = 0 : i64, scratch_operands = 1 : i64, tpu.core_type = #tpu.core_type<tc>} {
    %c0 = arith.constant 0 : index
    %c0_0 = arith.constant 0 : index
    %c0_1 = arith.constant 0 : index
    %0 = vector.load %arg0[%c0, %c0_0, %c0_1] : memref<2x4x512xf32, #tpu.memory_space<vmem>>, vector<1x4x384xf32>
    %1 = vector.shape_cast %0 : vector<1x4x384xf32> to vector<4x384xf32>
    %c0_2 = arith.constant 0 : index
    %c0_3 = arith.constant 0 : index
    %2 = vector.load %arg6[%c0_2, %c0_3] : memref<36x768xf32, #tpu.memory_space<vmem>>, vector<4x384xf32>
    tpu.vector_store %arg6[%c0_2, %c0_3], %1 {strides = array<i32>} : memref<36x768xf32, #tpu.memory_space<vmem>>, vector<4x384xf32>,
    %c1 = arith.constant 1 : index
    %c0_4 = arith.constant 0 : index
    %c0_5 = arith.constant 0 : index
    %3 = vector.load %arg0[%c1, %c0_4, %c0_5] : memref<2x4x512xf32, #tpu.memory_space<vmem>>, vector<1x4x384xf32>
    %4 = vector.shape_cast %3 : vector<1x4x384xf32> to vector<4x384xf32>
    %c0_6 = arith.constant 0 : index
    %c384 = arith.constant 384 : index
    %5 = vector.load %arg6[%c0_6, %c384] : memref<36x768xf32, #tpu.memory_space<vmem>>, vector<4x384xf32>
    tpu.vector_store %arg6[%c0_6, %c384], %4 {strides = array<i32>} : memref<36x768xf32, #tpu.memory_space<vmem>>, vector<4x384xf32>,
    %c0_7 = arith.constant 0 : index
    %c0_8 = arith.constant 0 : index
    %c1_9 = arith.constant 1 : index
    %6 = vector.load %arg0[%c0_7, %c0_8, %c1_9] : memref<2x4x512xf32, #tpu.memory_space<vmem>>, vector<1x4x384xf32>
    %7 = vector.shape_cast %6 : vector<1x4x384xf32> to vector<4x384xf32>
    %c4 = arith.constant 4 : index
    %c0_10 = arith.constant 0 : index
    %8 = vector.load %arg6[%c4, %c0_10] : memref<36x768xf32, #tpu.memory_space<vmem>>, vector<4x384xf32>
    tpu.vector_store %arg6[%c4, %c0_10], %7 {strides = array<i32>} : memref<36x768xf32, #tpu.memory_space<vmem>>, vector<4x384xf32>,
    %c1_11 = arith.constant 1 : index
    %c0_12 = arith.constant 0 : index
    %c1_13 = arith.constant 1 : index
    %9 = vector.load %arg0[%c1_11, %c0_12, %c1_13] : memref<2x4x512xf32, #tpu.memory_space<vmem>>, vector<1x4x384xf32>
    %10 = vector.shape_cast %9 : vector<1x4x384xf32> to vector<4x384xf32>
    %c4_14 = arith.constant 4 : index
    %c384_15 = arith.constant 384 : index
    %11 = vector.load %arg6[%c4_14, %c384_15] : memref<36x768xf32, #tpu.memory_space<vmem>>, vector<4x384xf32>
    tpu.vector_store %arg6[%c4_14, %c384_15], %10 {strides = array<i32>} : memref<36x768xf32, #tpu.memory_space<vmem>>, vector<4x384xf32>,
    %c0_16 = arith.constant 0 : index
    %c0_17 = arith.constant 0 : index
    %c2 = arith.constant 2 : index
    %12 = vector.load %arg0[%c0_16, %c0_17, %c2] : memref<2x4x512xf32, #tpu.memory_space<vmem>>, vector<1x4x384xf32>
    %13 = vector.shape_cast %12 : vector<1x4x384xf32> to vector<4x384xf32>
    %c8 = arith.constant 8 : index
    %c0_18 = arith.constant 0 : index
    %14 = vector.load %arg6[%c8, %c0_18] : memref<36x768xf32, #tpu.memory_space<vmem>>, vector<4x384xf32>
    tpu.vector_store %arg6[%c8, %c0_18], %13 {strides = array<i32>} : memref<36x768xf32, #tpu.memory_space<vmem>>, vector<4x384xf32>,
    %c1_19 = arith.constant 1 : index
    %c0_20 = arith.constant 0 : index
    %c2_21 = arith.constant 2 : index
    %15 = vector.load %arg0[%c1_19, %c0_20, %c2_21] : memref<2x4x512xf32, #tpu.memory_space<vmem>>, vector<1x4x384xf32>
    %16 = vector.shape_cast %15 : vector<1x4x384xf32> to vector<4x384xf32>
    %c8_22 = arith.constant 8 : index
    %c384_23 = arith.constant 384 : index
    %17 = vector.load %arg6[%c8_22, %c384_23] : memref<36x768xf32, #tpu.memory_space<vmem>>, vector<4x384xf32>
    tpu.vector_store %arg6[%c8_22, %c384_23], %16 {strides = array<i32>} : memref<36x768xf32, #tpu.memory_space<vmem>>, vector<4x384xf32>,
    %c0_24 = arith.constant 0 : index
    %c0_25 = arith.constant 0 : index
    %c18 = arith.constant 18 : index
    %18 = vector.load %arg0[%c0_24, %c0_25, %c18] : memref<2x4x512xf32, #tpu.memory_space<vmem>>, vector<1x4x384xf32>
    %19 = vector.shape_cast %18 : vector<1x4x384xf32> to vector<4x384xf32>
    %c12 = arith.constant 12 : index
    %c0_26 = arith.constant 0 : index
    %20 = vector.load %arg6[%c12, %c0_26] : memref<36x768xf32, #tpu.memory_space<vmem>>, vector<4x384xf32>
    tpu.vector_store %arg6[%c12, %c0_26], %19 {strides = array<i32>} : memref<36x768xf32, #tpu.memory_space<vmem>>, vector<4x384xf32>,
    %c1_27 = arith.constant 1 : index
    %c0_28 = arith.constant 0 : index
    %c18_29 = arith.constant 18 : index
    %21 = vector.load %arg0[%c1_27, %c0_28, %c18_29] : memref<2x4x512xf32, #tpu.memory_space<vmem>>, vector<1x4x384xf32>
    %22 = vector.shape_cast %21 : vector<1x4x384xf32> to vector<4x384xf32>
    %c12_30 = arith.constant 12 : index
    %c384_31 = arith.constant 384 : index
    %23 = vector.load %arg6[%c12_30, %c384_31] : memref<36x768xf32, #tpu.memory_space<vmem>>, vector<4x384xf32>
    tpu.vector_store %arg6[%c12_30, %c384_31], %22 {strides = array<i32>} : memref<36x768xf32, #tpu.memory_space<vmem>>, vector<4x384xf32>,
    %c0_32 = arith.constant 0 : index
    %c0_33 = arith.constant 0 : index
    %c19 = arith.constant 19 : index
    %24 = vector.load %arg0[%c0_32, %c0_33, %c19] : memref<2x4x512xf32, #tpu.memory_space<vmem>>, vector<1x4x384xf32>
    %25 = vector.shape_cast %24 : vector<1x4x384xf32> to vector<4x384xf32>
    %c16 = arith.constant 16 : index
    %c0_34 = arith.constant 0 : index
    %26 = vector.load %arg6[%c16, %c0_34] : memref<36x768xf32, #tpu.memory_space<vmem>>, vector<4x384xf32>
    tpu.vector_store %arg6[%c16, %c0_34], %25 {strides = array<i32>} : memref<36x768xf32, #tpu.memory_space<vmem>>, vector<4x384xf32>,
    %c1_35 = arith.constant 1 : index
    %c0_36 = arith.constant 0 : index
    %c19_37 = arith.constant 19 : index
    %27 = vector.load %arg0[%c1_35, %c0_36, %c19_37] : memref<2x4x512xf32, #tpu.memory_space<vmem>>, vector<1x4x384xf32>
    %28 = vector.shape_cast %27 : vector<1x4x384xf32> to vector<4x384xf32>
    %c16_38 = arith.constant 16 : index
    %c384_39 = arith.constant 384 : index
    %29 = vector.load %arg6[%c16_38, %c384_39] : memref<36x768xf32, #tpu.memory_space<vmem>>, vector<4x384xf32>
    tpu.vector_store %arg6[%c16_38, %c384_39], %28 {strides = array<i32>} : memref<36x768xf32, #tpu.memory_space<vmem>>, vector<4x384xf32>,
    %c0_40 = arith.constant 0 : index
    %c0_41 = arith.constant 0 : index
    %c20 = arith.constant 20 : index
    %30 = vector.load %arg0[%c0_40, %c0_41, %c20] : memref<2x4x512xf32, #tpu.memory_space<vmem>>, vector<1x4x384xf32>
    %31 = vector.shape_cast %30 : vector<1x4x384xf32> to vector<4x384xf32>
    %c20_42 = arith.constant 20 : index
    %c0_43 = arith.constant 0 : index
    %32 = vector.load %arg6[%c20_42, %c0_43] : memref<36x768xf32, #tpu.memory_space<vmem>>, vector<4x384xf32>
    tpu.vector_store %arg6[%c20_42, %c0_43], %31 {strides = array<i32>} : memref<36x768xf32, #tpu.memory_space<vmem>>, vector<4x384xf32>,
    %c1_44 = arith.constant 1 : index
    %c0_45 = arith.constant 0 : index
    %c20_46 = arith.constant 20 : index
    %33 = vector.load %arg0[%c1_44, %c0_45, %c20_46] : memref<2x4x512xf32, #tpu.memory_space<vmem>>, vector<1x4x384xf32>
    %34 = vector.shape_cast %33 : vector<1x4x384xf32> to vector<4x384xf32>
    %c20_47 = arith.constant 20 : index
    %c384_48 = arith.constant 384 : index
    %35 = vector.load %arg6[%c20_47, %c384_48] : memref<36x768xf32, #tpu.memory_space<vmem>>, vector<4x384xf32>
    tpu.vector_store %arg6[%c20_47, %c384_48], %34 {strides = array<i32>} : memref<36x768xf32, #tpu.memory_space<vmem>>, vector<4x384xf32>,
    %c0_49 = arith.constant 0 : index
    %c0_50 = arith.constant 0 : index
    %c36 = arith.constant 36 : index
    %36 = vector.load %arg0[%c0_49, %c0_50, %c36] : memref<2x4x512xf32, #tpu.memory_space<vmem>>, vector<1x4x384xf32>
    %37 = vector.shape_cast %36 : vector<1x4x384xf32> to vector<4x384xf32>
    %c24 = arith.constant 24 : index
    %c0_51 = arith.constant 0 : index
    %38 = vector.load %arg6[%c24, %c0_51] : memref<36x768xf32, #tpu.memory_space<vmem>>, vector<4x384xf32>
    tpu.vector_store %arg6[%c24, %c0_51], %37 {strides = array<i32>} : memref<36x768xf32, #tpu.memory_space<vmem>>, vector<4x384xf32>,
    %c1_52 = arith.constant 1 : index
    %c0_53 = arith.constant 0 : index
    %c36_54 = arith.constant 36 : index
    %39 = vector.load %arg0[%c1_52, %c0_53, %c36_54] : memref<2x4x512xf32, #tpu.memory_space<vmem>>, vector<1x4x384xf32>
    %40 = vector.shape_cast %39 : vector<1x4x384xf32> to vector<4x384xf32>
    %c24_55 = arith.constant 24 : index
    %c384_56 = arith.constant 384 : index
    %41 = vector.load %arg6[%c24_55, %c384_56] : memref<36x768xf32, #tpu.memory_space<vmem>>, vector<4x384xf32>
    tpu.vector_store %arg6[%c24_55, %c384_56], %40 {strides = array<i32>} : memref<36x768xf32, #tpu.memory_space<vmem>>, vector<4x384xf32>,
    %c0_57 = arith.constant 0 : index
    %c0_58 = arith.constant 0 : index
    %c37 = arith.constant 37 : index
    %42 = vector.load %arg0[%c0_57, %c0_58, %c37] : memref<2x4x512xf32, #tpu.memory_space<vmem>>, vector<1x4x384xf32>
    %43 = vector.shape_cast %42 : vector<1x4x384xf32> to vector<4x384xf32>
    %c28 = arith.constant 28 : index
    %c0_59 = arith.constant 0 : index
    %44 = vector.load %arg6[%c28, %c0_59] : memref<36x768xf32, #tpu.memory_space<vmem>>, vector<4x384xf32>
    tpu.vector_store %arg6[%c28, %c0_59], %43 {strides = array<i32>} : memref<36x768xf32, #tpu.memory_space<vmem>>, vector<4x384xf32>,
    %c1_60 = arith.constant 1 : index
    %c0_61 = arith.constant 0 : index
    %c37_62 = arith.constant 37 : index
    %45 = vector.load %arg0[%c1_60, %c0_61, %c37_62] : memref<2x4x512xf32, #tpu.memory_space<vmem>>, vector<1x4x384xf32>
    %46 = vector.shape_cast %45 : vector<1x4x384xf32> to vector<4x384xf32>
    %c28_63 = arith.constant 28 : index
    %c384_64 = arith.constant 384 : index
    %47 = vector.load %arg6[%c28_63, %c384_64] : memref<36x768xf32, #tpu.memory_space<vmem>>, vector<4x384xf32>
    tpu.vector_store %arg6[%c28_63, %c384_64], %46 {strides = array<i32>} : memref<36x768xf32, #tpu.memory_space<vmem>>, vector<4x384xf32>,
    %c0_65 = arith.constant 0 : index
    %c0_66 = arith.constant 0 : index
    %c38 = arith.constant 38 : index
    %48 = vector.load %arg0[%c0_65, %c0_66, %c38] : memref<2x4x512xf32, #tpu.memory_space<vmem>>, vector<1x4x384xf32>
    %49 = vector.shape_cast %48 : vector<1x4x384xf32> to vector<4x384xf32>
    %c32 = arith.constant 32 : index
    %c0_67 = arith.constant 0 : index
    %50 = vector.load %arg6[%c32, %c0_67] : memref<36x768xf32, #tpu.memory_space<vmem>>, vector<4x384xf32>
    tpu.vector_store %arg6[%c32, %c0_67], %49 {strides = array<i32>} : memref<36x768xf32, #tpu.memory_space<vmem>>, vector<4x384xf32>,
    %c1_68 = arith.constant 1 : index
    %c0_69 = arith.constant 0 : index
    %c38_70 = arith.constant 38 : index
    %51 = vector.load %arg0[%c1_68, %c0_69, %c38_70] : memref<2x4x512xf32, #tpu.memory_space<vmem>>, vector<1x4x384xf32>
    %52 = vector.shape_cast %51 : vector<1x4x384xf32> to vector<4x384xf32>
    %c32_71 = arith.constant 32 : index
    %c384_72 = arith.constant 384 : index
    %53 = vector.load %arg6[%c32_71, %c384_72] : memref<36x768xf32, #tpu.memory_space<vmem>>, vector<4x384xf32>
    tpu.vector_store %arg6[%c32_71, %c384_72], %52 {strides = array<i32>} : memref<36x768xf32, #tpu.memory_space<vmem>>, vector<4x384xf32>,
    %c0_73 = arith.constant 0 : index
    %c0_74 = arith.constant 0 : index
    %54 = vector.load %arg1[%c0_73, %c0_74] : memref<8x36xf32, #tpu.memory_space<vmem>>, vector<8x36xf32>
    %c0_75 = arith.constant 0 : index
    %c0_76 = arith.constant 0 : index
    %55 = vector.load %arg6[%c0_75, %c0_76] : memref<36x768xf32, #tpu.memory_space<vmem>>, vector<36x768xf32>
    %cst = arith.constant dense<0.000000e+00> : vector<8x768xf32>
    %56 = tpu.matmul %54, %55, %cst {dimension_numbers = #tpu.dot_dimension_numbers<[1], [0], [0], [1], [0, 0, 1, 1], [], []>} : vector<8x36xf32>, vector<36x768xf32>, vector<8x768xf32> -> vector<8x768xf32>
    %57 = tpu.iota {dimensions = array<i32: 1>} : vector<1x768xi32>
    %c384_i32 = arith.constant 384 : i32
    %c0_i32 = arith.constant 0 : i32
    %58 = arith.cmpi eq, %c384_i32, %c0_i32 : i32
    %c1_i32 = arith.constant 1 : i32
    %59 = arith.select %58, %c1_i32, %c384_i32 : i32
    %60 = vector.broadcast %59 : i32 to vector<1x768xi32>
    %61 = arith.remsi %57, %60 : vector<1x768xi32>
    %c0_i32_77 = arith.constant 0 : i32
    %62 = vector.broadcast %c0_i32_77 : i32 to vector<1x768xi32>
    %63 = arith.cmpi ne, %61, %62 : vector<1x768xi32>
    %c0_i32_78 = arith.constant 0 : i32
    %64 = vector.broadcast %c0_i32_78 : i32 to vector<1x768xi32>
    %65 = arith.cmpi slt, %61, %64 : vector<1x768xi32>
    %c0_i32_79 = arith.constant 0 : i32
    %66 = arith.cmpi slt, %59, %c0_i32_79 : i32
    %67 = vector.broadcast %66 : i1 to vector<1x768xi1>
    %68 = vector.broadcast %67 : vector<1x768xi1> to vector<1x768xi1>
    %69 = arith.xori %65, %68 : vector<1x768xi1>
    %70 = arith.andi %69, %63 : vector<1x768xi1>
    %71 = vector.broadcast %59 : i32 to vector<1x768xi32>
    %72 = arith.addi %61, %71 : vector<1x768xi32>
    %73 = arith.select %70, %72, %61 : vector<1x768xi1>, vector<1x768xi32>
    %c288_i32 = arith.constant 288 : i32
    %74 = vector.broadcast %c288_i32 : i32 to vector<1x768xi32>
    %75 = arith.cmpi slt, %73, %74 : vector<1x768xi32>
    %c18_i32 = arith.constant 18 : i32
    %c0_i32_80 = arith.constant 0 : i32
    %76 = arith.cmpi eq, %c18_i32, %c0_i32_80 : i32
    %c1_i32_81 = arith.constant 1 : i32
    %77 = arith.select %76, %c1_i32_81, %c18_i32 : i32
    %78 = vector.broadcast %77 : i32 to vector<1x768xi32>
    %79 = arith.remsi %73, %78 : vector<1x768xi32>
    %c0_i32_82 = arith.constant 0 : i32
    %80 = vector.broadcast %c0_i32_82 : i32 to vector<1x768xi32>
    %81 = arith.cmpi ne, %79, %80 : vector<1x768xi32>
    %c0_i32_83 = arith.constant 0 : i32
    %82 = vector.broadcast %c0_i32_83 : i32 to vector<1x768xi32>
    %83 = arith.cmpi slt, %79, %82 : vector<1x768xi32>
    %c0_i32_84 = arith.constant 0 : i32
    %84 = arith.cmpi slt, %77, %c0_i32_84 : i32
    %85 = vector.broadcast %84 : i1 to vector<1x768xi1>
    %86 = vector.broadcast %85 : vector<1x768xi1> to vector<1x768xi1>
    %87 = arith.xori %83, %86 : vector<1x768xi1>
    %88 = arith.andi %87, %81 : vector<1x768xi1>
    %89 = vector.broadcast %77 : i32 to vector<1x768xi32>
    %90 = arith.addi %79, %89 : vector<1x768xi32>
    %91 = arith.select %88, %90, %79 : vector<1x768xi1>, vector<1x768xi32>
    %c16_i32 = arith.constant 16 : i32
    %92 = vector.broadcast %c16_i32 : i32 to vector<1x768xi32>
    %93 = arith.cmpi slt, %91, %92 : vector<1x768xi32>
    %94 = arith.andi %75, %93 : vector<1x768xi1>
    %95 = arith.extui %94 : vector<1x768xi1> to vector<1x768xi32>
    %96 = arith.sitofp %95 : vector<1x768xi32> to vector<1x768xf32>
    %97 = vector.broadcast %96 : vector<1x768xf32> to vector<8x768xf32>
    %98 = arith.mulf %56, %97 : vector<8x768xf32>
    %cst_85 = arith.constant dense<0.000000e+00> : vector<8xf32>
    %99 = vector.multi_reduction <add>, %98, %cst_85 [1] : vector<8x768xf32> to vector<8xf32>
    %100 = vector.shape_cast %99 : vector<8xf32> to vector<8x1xf32>
    %cst_86 = arith.constant 5.120000e+02 : f32
    %101 = vector.broadcast %cst_86 : f32 to vector<8x1xf32>
    %102 = arith.divf %100, %101 : vector<8x1xf32>
    %103 = arith.mulf %98, %98 : vector<8x768xf32>
    %cst_87 = arith.constant dense<0.000000e+00> : vector<8xf32>
    %104 = vector.multi_reduction <add>, %103, %cst_87 [1] : vector<8x768xf32> to vector<8xf32>
    %105 = vector.shape_cast %104 : vector<8xf32> to vector<8x1xf32>
    %cst_88 = arith.constant 5.120000e+02 : f32
    %106 = vector.broadcast %cst_88 : f32 to vector<8x1xf32>
    %107 = arith.divf %105, %106 : vector<8x1xf32>
    %108 = arith.mulf %102, %102 : vector<8x1xf32>
    %109 = arith.subf %107, %108 : vector<8x1xf32>
    %cst_89 = arith.constant 9.99999974E-6 : f32
    %110 = vector.broadcast %cst_89 : f32 to vector<8x1xf32>
    %111 = arith.addf %109, %110 : vector<8x1xf32>
    %112 = math.rsqrt %111 : vector<8x1xf32>
    %c0_90 = arith.constant 0 : index
    %c0_91 = arith.constant 0 : index
    %113 = vector.load %arg3[%c0_90, %c0_91] : memref<16x32xf32, #tpu.memory_space<vmem>>, vector<16x32xf32>
    %c0_92 = arith.constant 0 : index
    %c0_93 = arith.constant 0 : index
    %114 = vector.load %arg4[%c0_92, %c0_93] : memref<16x1xf32, #tpu.memory_space<vmem>>, vector<16x1xf32>
    %c0_94 = arith.constant 0 : index
    %c0_95 = arith.constant 0 : index
    %115 = vector.load %arg2[%c0_94, %c0_95] : memref<2x32xf32, #tpu.memory_space<vmem>>, vector<2x32xf32>
    %116 = vector.extract_strided_slice %115 {offsets = [0, 0], sizes = [1, 32], strides = [1, 1]} : vector<2x32xf32> to vector<1x32xf32>
    %117 = vector.broadcast %116 : vector<1x32xf32> to vector<16x32xf32>
    %118 = arith.mulf %113, %117 : vector<16x32xf32>
    %cst_96 = arith.constant dense<0.000000e+00> : vector<16xf32>
    %119 = vector.multi_reduction <add>, %118, %cst_96 [1] : vector<16x32xf32> to vector<16xf32>
    %120 = vector.shape_cast %119 : vector<16xf32> to vector<16x1xf32>
    %121 = arith.addf %120, %114 : vector<16x1xf32>
    %cst_97 = arith.constant 0.000000e+00 : f32
    %122 = vector.broadcast %cst_97 : f32 to vector<16x1xf32>
    %123 = arith.cmpf oge, %121, %122 : vector<16x1xf32>
    %cst_98 = arith.constant 2.000000e-01 : f32
    %124 = vector.broadcast %cst_98 : f32 to vector<16x1xf32>
    %125 = arith.mulf %124, %121 : vector<16x1xf32>
    %126 = arith.select %123, %121, %125 : vector<16x1xi1>, vector<16x1xf32>
    %127 = vector.extract_strided_slice %126 {offsets = [0, 0], sizes = [8, 1], strides = [1, 1]} : vector<16x1xf32> to vector<8x1xf32>
    %cst_99 = arith.constant 1.000000e+00 : f32
    %128 = vector.broadcast %cst_99 : f32 to vector<8x1xf32>
    %129 = arith.addf %127, %128 : vector<8x1xf32>
    %130 = arith.mulf %129, %112 : vector<8x1xf32>
    %131 = vector.extract_strided_slice %126 {offsets = [8, 0], sizes = [8, 1], strides = [1, 1]} : vector<16x1xf32> to vector<8x1xf32>
    %132 = arith.mulf %102, %130 : vector<8x1xf32>
    %133 = arith.subf %131, %132 : vector<8x1xf32>
    %134 = vector.extract_strided_slice %56 {offsets = [0, 0], sizes = [8, 384], strides = [1, 1]} : vector<8x768xf32> to vector<8x384xf32>
    %135 = vector.broadcast %130 : vector<8x1xf32> to vector<8x384xf32>
    %136 = arith.mulf %134, %135 : vector<8x384xf32>
    %137 = vector.broadcast %133 : vector<8x1xf32> to vector<8x384xf32>
    %138 = arith.addf %136, %137 : vector<8x384xf32>
    %cst_100 = arith.constant 0.000000e+00 : f32
    %139 = vector.broadcast %cst_100 : f32 to vector<8x384xf32>
    %140 = arith.maximumf %138, %139 : vector<8x384xf32>
    %c0_101 = arith.constant 0 : index
    %c0_102 = arith.constant 0 : index
    %141 = vector.load %arg5[%c0_101, %c0_102] : memref<8x768xf32, #tpu.memory_space<vmem>>, vector<8x384xf32>
    tpu.vector_store %arg5[%c0_101, %c0_102], %140 {strides = array<i32>} : memref<8x768xf32, #tpu.memory_space<vmem>>, vector<8x384xf32>,
    %142 = vector.extract_strided_slice %115 {offsets = [1, 0], sizes = [1, 32], strides = [1, 1]} : vector<2x32xf32> to vector<1x32xf32>
    %143 = vector.broadcast %142 : vector<1x32xf32> to vector<16x32xf32>
    %144 = arith.mulf %113, %143 : vector<16x32xf32>
    %cst_103 = arith.constant dense<0.000000e+00> : vector<16xf32>
    %145 = vector.multi_reduction <add>, %144, %cst_103 [1] : vector<16x32xf32> to vector<16xf32>
    %146 = vector.shape_cast %145 : vector<16xf32> to vector<16x1xf32>
    %147 = arith.addf %146, %114 : vector<16x1xf32>
    %cst_104 = arith.constant 0.000000e+00 : f32
    %148 = vector.broadcast %cst_104 : f32 to vector<16x1xf32>
    %149 = arith.cmpf oge, %147, %148 : vector<16x1xf32>
    %cst_105 = arith.constant 2.000000e-01 : f32
    %150 = vector.broadcast %cst_105 : f32 to vector<16x1xf32>
    %151 = arith.mulf %150, %147 : vector<16x1xf32>
    %152 = arith.select %149, %147, %151 : vector<16x1xi1>, vector<16x1xf32>
    %153 = vector.extract_strided_slice %152 {offsets = [0, 0], sizes = [8, 1], strides = [1, 1]} : vector<16x1xf32> to vector<8x1xf32>
    %cst_106 = arith.constant 1.000000e+00 : f32
    %154 = vector.broadcast %cst_106 : f32 to vector<8x1xf32>
    %155 = arith.addf %153, %154 : vector<8x1xf32>
    %156 = arith.mulf %155, %112 : vector<8x1xf32>
    %157 = vector.extract_strided_slice %152 {offsets = [8, 0], sizes = [8, 1], strides = [1, 1]} : vector<16x1xf32> to vector<8x1xf32>
    %158 = arith.mulf %102, %156 : vector<8x1xf32>
    %159 = arith.subf %157, %158 : vector<8x1xf32>
    %160 = vector.extract_strided_slice %56 {offsets = [0, 384], sizes = [8, 384], strides = [1, 1]} : vector<8x768xf32> to vector<8x384xf32>
    %161 = vector.broadcast %156 : vector<8x1xf32> to vector<8x384xf32>
    %162 = arith.mulf %160, %161 : vector<8x384xf32>
    %163 = vector.broadcast %159 : vector<8x1xf32> to vector<8x384xf32>
    %164 = arith.addf %162, %163 : vector<8x384xf32>
    %cst_107 = arith.constant 0.000000e+00 : f32
    %165 = vector.broadcast %cst_107 : f32 to vector<8x384xf32>
    %166 = arith.maximumf %164, %165 : vector<8x384xf32>
    %c0_108 = arith.constant 0 : index
    %c384_109 = arith.constant 384 : index
    %167 = vector.load %arg5[%c0_108, %c384_109] : memref<8x768xf32, #tpu.memory_space<vmem>>, vector<8x384xf32>
    tpu.vector_store %arg5[%c0_108, %c384_109], %166 {strides = array<i32>} : memref<8x768xf32, #tpu.memory_space<vmem>>, vector<8x384xf32>,
    return
  }
}

</mosaic_0001>

<llo_original>
// kernel: styled_conv_block.1
$region0: #{styled_conv_block.1}
  #allocation0 [shape = 'u32[]', space=smem, size = 0x4, offset = 0x4, fixed_abs, tag = 'smem constant byte address 0x4 - core index']
  #allocation1 [shape = 'u32[144,128]{1,0:T(1,128)}', space=vmem, size = 0x12000, scoped, tag = 'internal scratch']
  #allocation2 [shape = 'f32[36,768]{1,0:T(8,128)}', space=vmem, size = 0x1e000, scoped, tag = 'scratch operand']
  %s0 = inlined_call_operand.vmem [shape: f32[2,4,512], index: 0, kind: input, shape index: {}]
  %s1 = inlined_call_operand.vmem [shape: f32[8,36], index: 1, kind: input, shape index: {}]
  %s2 = inlined_call_operand.vmem [shape: f32[2,32], index: 2, kind: input, shape index: {}]
  %s3 = inlined_call_operand.vmem [shape: f32[16,32], index: 3, kind: input, shape index: {}]
  %s4 = inlined_call_operand.vmem [shape: f32[16,1], index: 4, kind: input, shape index: {}]
  %s5 = inlined_call_operand.vmem [shape: f32[8,768], index: 5, kind: output, shape index: {}]
  %s6 = sld [smem:[#allocation0]]
  $region30: #{styled_conv_block.1} parent=0
    _
  %s8 = ssub.s32 1, %s6
  %s9 = scalar_select 0, %s8, %s6
  // Predicated region
  $region2: #{styled_conv_block.1} parent=0 // pred_check
    _
  $region3: #{styled_conv_block.1} parent=0 // pred_check_branch
    %11 = sbr.rel (0) target = $region5
  $region4: #{styled_conv_block.1} parent=0 // pred_region
    _
  $region5: #{styled_conv_block.1} parent=0 // pred_fallthru
    _
  // Predicated region
  $region6: #{styled_conv_block.1} parent=0 // pred_check
    _
  $region7: #{styled_conv_block.1} parent=0 // pred_check_branch
    %13 = sbr.rel (0) target = $region9
  $region8: #{styled_conv_block.1} parent=0 // pred_region
    _
  $region9: #{styled_conv_block.1} parent=0 // pred_fallthru
    _
  // Predicated region
  $region10: #{styled_conv_block.1} parent=0 // pred_check
    _
  $region11: #{styled_conv_block.1} parent=0 // pred_check_branch
    %15 = sbr.rel (0) target = $region13
  $region12: #{styled_conv_block.1} parent=0 // pred_region
    _
  $region13: #{styled_conv_block.1} parent=0 // pred_fallthru
    _
  // Predicated region
  $region14: #{styled_conv_block.1} parent=0 // pred_check
    _
  $region15: #{styled_conv_block.1} parent=0 // pred_check_branch
    %17 = sbr.rel (0) target = $region17
  $region16: #{styled_conv_block.1} parent=0 // pred_region
    _
  $region17: #{styled_conv_block.1} parent=0 // pred_fallthru
    _
  // Predicated region
  $region18: #{styled_conv_block.1} parent=0 // pred_check
    _
  $region19: #{styled_conv_block.1} parent=0 // pred_check_branch
    %19 = sbr.rel (0) target = $region21
  $region20: #{styled_conv_block.1} parent=0 // pred_region
    _
  $region21: #{styled_conv_block.1} parent=0 // pred_fallthru
    _
  %v20 = vld [vmem:[%s0] sm:$0xff]
  %v21 = vld [vmem:[%s0 + $0x8] sm:$0xf]
  %v23 = vcombine.high %v20, %v20
  %25 = vst [vmem:[#allocation2] sm:$0xf] %v20
  %26 = vst [vmem:[#allocation2 + $0x8] sm:$0xf] %v23
  %27 = vst [vmem:[#allocation2 + $0x10] sm:$0xf] %v21
  %s28 = scalar_lea.vmem %s0, 16
  %v29 = vld [vmem:[%s28] sm:$0xff]
  %v30 = vld [vmem:[%s28 + $0x8] sm:$0xf]
  %v32 = vcombine.high %v29, %v29
  %34 = vst [vmem:[#allocation2 + $0x18] sm:$0xf] %v29
  %35 = vst [vmem:[#allocation2 + $0x20] sm:$0xf] %v32
  %36 = vst [vmem:[#allocation2 + $0x28] sm:$0xf] %v30
  %v37 = vld [vmem:[%s0] sm:$0xff]
  %v38 = vld [vmem:[%s0 + $0x8] sm:$0xff]
  %v41 = vcombine.low %v37, %v37
  %v42 = vcombine.low %v38, %v38
  %43 = vrot.lane.b32.xlu0 %v41, 127
  %v44 = vpop.permute.xlu0 %43
  %45 = vrot.lane.b32.xlu0 %v37, 127
  %v46 = vpop.permute.xlu0 %45
  %47 = vrot.lane.b32.xlu0 %v42, 127
  %v48 = vpop.permute.xlu0 %47
  %49 = vrot.lane.b32.xlu0 %v38, 127
  %v50 = vpop.permute.xlu0 %49
  %vm51 = vcmask 1039360
  %v52 = vsel %vm51, %v44, %v46
  %v53 = vsel %vm51, %v46, %v48
  %v54 = vsel %vm51, %v48, %v50
  %58 = vst [vmem:[#allocation2] sm:$0xf0] %v52
  %59 = vst [vmem:[#allocation2 + $0x8] sm:$0xf0] %v53
  %60 = vst [vmem:[#allocation2 + $0x10] sm:$0xf0] %v54
  %v61 = vld [vmem:[%s28] sm:$0xff]
  %v62 = vld [vmem:[%s28 + $0x8] sm:$0xff]
  %v65 = vcombine.low %v61, %v61
  %v66 = vcombine.low %v62, %v62
  %67 = vrot.lane.b32.xlu0 %v65, 127
  %v68 = vpop.permute.xlu0 %67
  %69 = vrot.lane.b32.xlu0 %v61, 127
  %v70 = vpop.permute.xlu0 %69
  %71 = vrot.lane.b32.xlu0 %v66, 127
  %v72 = vpop.permute.xlu0 %71
  %73 = vrot.lane.b32.xlu0 %v62, 127
  %v74 = vpop.permute.xlu0 %73
  %v75 = vsel %vm51, %v68, %v70
  %v76 = vsel %vm51, %v70, %v72
  %v77 = vsel %vm51, %v72, %v74
  %81 = vst [vmem:[#allocation2 + $0x18] sm:$0xf0] %v75
  %82 = vst [vmem:[#allocation2 + $0x20] sm:$0xf0] %v76
  %83 = vst [vmem:[#allocation2 + $0x28] sm:$0xf0] %v77
  %v84 = vld [vmem:[%s0] sm:$0xff]
  %v85 = vld [vmem:[%s0 + $0x8] sm:$0xff]
  %v88 = vcombine.high %v84, %v84
  %v89 = vcombine.high %v85, %v85
  %90 = vrot.lane.b32.xlu0 %v84, 126
  %v91 = vpop.permute.xlu0 %90
  %92 = vrot.lane.b32.xlu0 %v88, 126
  %v93 = vpop.permute.xlu0 %92
  %94 = vrot.lane.b32.xlu0 %v85, 126
  %v95 = vpop.permute.xlu0 %94
  %96 = vrot.lane.b32.xlu0 %v89, 126
  %v97 = vpop.permute.xlu0 %96
  %vm98 = vcmask 1031168
  %v99 = vsel %vm98, %v91, %v93
  %v100 = vsel %vm98, %v93, %v95
  %v101 = vsel %vm98, %v95, %v97
  %105 = vst [vmem:[#allocation2 + $0x30] sm:$0xf] %v99
  %106 = vst [vmem:[#allocation2 + $0x38] sm:$0xf] %v100
  %107 = vst [vmem:[#allocation2 + $0x40] sm:$0xf] %v101
  %v108 = vld [vmem:[%s28] sm:$0xff]
  %v109 = vld [vmem:[%s28 + $0x8] sm:$0xff]
  %v112 = vcombine.high %v108, %v108
  %v113 = vcombine.high %v109, %v109
  %114 = vrot.lane.b32.xlu0 %v108, 126
  %v115 = vpop.permute.xlu0 %114
  %116 = vrot.lane.b32.xlu0 %v112, 126
  %v117 = vpop.permute.xlu0 %116
  %118 = vrot.lane.b32.xlu0 %v109, 126
  %v119 = vpop.permute.xlu0 %118
  %120 = vrot.lane.b32.xlu0 %v113, 126
  %v121 = vpop.permute.xlu0 %120
  %v122 = vsel %vm98, %v115, %v117
  %v123 = vsel %vm98, %v117, %v119
  %v124 = vsel %vm98, %v119, %v121
  %128 = vst [vmem:[#allocation2 + $0x48] sm:$0xf] %v122
  %129 = vst [vmem:[#allocation2 + $0x50] sm:$0xf] %v123
  %130 = vst [vmem:[#allocation2 + $0x58] sm:$0xf] %v124
  %v131 = vld [vmem:[%s0] sm:$0xff]
  %v132 = vld [vmem:[%s0 + $0x8] sm:$0xff]
  %v135 = vcombine.low %v131, %v131
  %v136 = vcombine.low %v132, %v132
  %137 = vrot.lane.b32.xlu0 %v135, 110
  %v138 = vpop.permute.xlu0 %137
  %139 = vrot.lane.b32.xlu0 %v131, 110
  %v140 = vpop.permute.xlu0 %139
  %141 = vrot.lane.b32.xlu0 %v136, 110
  %v142 = vpop.permute.xlu0 %141
  %143 = vrot.lane.b32.xlu0 %v132, 110
  %v144 = vpop.permute.xlu0 %143
  %vm145 = vcmask 900096
  %v146 = vsel %vm145, %v138, %v140
  %v147 = vsel %vm145, %v140, %v142
  %v148 = vsel %vm145, %v142, %v144
  %152 = vst [vmem:[#allocation2 + $0x30] sm:$0xf0] %v146
  %153 = vst [vmem:[#allocation2 + $0x38] sm:$0xf0] %v147
  %154 = vst [vmem:[#allocation2 + $0x40] sm:$0xf0] %v148
  %v155 = vld [vmem:[%s28] sm:$0xff]
  %v156 = vld [vmem:[%s28 + $0x8] sm:$0xff]
  %v159 = vcombine.low %v155, %v155
  %v160 = vcombine.low %v156, %v156
  %161 = vrot.lane.b32.xlu0 %v159, 110
  %v162 = vpop.permute.xlu0 %161
  %163 = vrot.lane.b32.xlu0 %v155, 110
  %v164 = vpop.permute.xlu0 %163
  %165 = vrot.lane.b32.xlu0 %v160, 110
  %v166 = vpop.permute.xlu0 %165
  %167 = vrot.lane.b32.xlu0 %v156, 110
  %v168 = vpop.permute.xlu0 %167
  %v169 = vsel %vm145, %v162, %v164
  %v170 = vsel %vm145, %v164, %v166
  %v171 = vsel %vm145, %v166, %v168
  %175 = vst [vmem:[#allocation2 + $0x48] sm:$0xf0] %v169
  %176 = vst [vmem:[#allocation2 + $0x50] sm:$0xf0] %v170
  %177 = vst [vmem:[#allocation2 + $0x58] sm:$0xf0] %v171
  %v178 = vld [vmem:[%s0] sm:$0xff]
  %v179 = vld [vmem:[%s0 + $0x8] sm:$0xff]
  %v182 = vcombine.high %v178, %v178
  %v183 = vcombine.high %v179, %v179
  %184 = vrot.lane.b32.xlu0 %v178, 109
  %v185 = vpop.permute.xlu0 %184
  %186 = vrot.lane.b32.xlu0 %v182, 109
  %v187 = vpop.permute.xlu0 %186
  %188 = vrot.lane.b32.xlu0 %v179, 109
  %v189 = vpop.permute.xlu0 %188
  %190 = vrot.lane.b32.xlu0 %v183, 109
  %v191 = vpop.permute.xlu0 %190
  %vm192 = vcmask 891904
  %v193 = vsel %vm192, %v185, %v187
  %v194 = vsel %vm192, %v187, %v189
  %v195 = vsel %vm192, %v189, %v191
  %199 = vst [vmem:[#allocation2 + $0x60] sm:$0xf] %v193
  %200 = vst [vmem:[#allocation2 + $0x68] sm:$0xf] %v194
  %201 = vst [vmem:[#allocation2 + $0x70] sm:$0xf] %v195
  %v202 = vld [vmem:[%s28] sm:$0xff]
  %v203 = vld [vmem:[%s28 + $0x8] sm:$0xff]
  %v206 = vcombine.high %v202, %v202
  %v207 = vcombine.high %v203, %v203
  %208 = vrot.lane.b32.xlu0 %v202, 109
  %v209 = vpop.permute.xlu0 %208
  %210 = vrot.lane.b32.xlu0 %v206, 109
  %v211 = vpop.permute.xlu0 %210
  %212 = vrot.lane.b32.xlu0 %v203, 109
  %v213 = vpop.permute.xlu0 %212
  %214 = vrot.lane.b32.xlu0 %v207, 109
  %v215 = vpop.permute.xlu0 %214
  %v216 = vsel %vm192, %v209, %v211
  %v217 = vsel %vm192, %v211, %v213
  %v218 = vsel %vm192, %v213, %v215
  %222 = vst [vmem:[#allocation2 + $0x78] sm:$0xf] %v216
  %223 = vst [vmem:[#allocation2 + $0x80] sm:$0xf] %v217
  %224 = vst [vmem:[#allocation2 + $0x88] sm:$0xf] %v218
  %v225 = vld [vmem:[%s0] sm:$0xff]
  %v226 = vld [vmem:[%s0 + $0x8] sm:$0xff]
  %v229 = vcombine.low %v225, %v225
  %v230 = vcombine.low %v226, %v226
  %231 = vrot.lane.b32.xlu0 %v229, 108
  %v232 = vpop.permute.xlu0 %231
  %233 = vrot.lane.b32.xlu0 %v225, 108
  %v234 = vpop.permute.xlu0 %233
  %235 = vrot.lane.b32.xlu0 %v230, 108
  %v236 = vpop.permute.xlu0 %235
  %237 = vrot.lane.b32.xlu0 %v226, 108
  %v238 = vpop.permute.xlu0 %237
  %vm239 = vcmask 883712
  %v240 = vsel %vm239, %v232, %v234
  %v241 = vsel %vm239, %v234, %v236
  %v242 = vsel %vm239, %v236, %v238
  %246 = vst [vmem:[#allocation2 + $0x60] sm:$0xf0] %v240
  %247 = vst [vmem:[#allocation2 + $0x68] sm:$0xf0] %v241
  %248 = vst [vmem:[#allocation2 + $0x70] sm:$0xf0] %v242
  %v249 = vld [vmem:[%s28] sm:$0xff]
  %v250 = vld [vmem:[%s28 + $0x8] sm:$0xff]
  %v253 = vcombine.low %v249, %v249
  %v254 = vcombine.low %v250, %v250
  %255 = vrot.lane.b32.xlu0 %v253, 108
  %v256 = vpop.permute.xlu0 %255
  %257 = vrot.lane.b32.xlu0 %v249, 108
  %v258 = vpop.permute.xlu0 %257
  %259 = vrot.lane.b32.xlu0 %v254, 108
  %v260 = vpop.permute.xlu0 %259
  %261 = vrot.lane.b32.xlu0 %v250, 108
  %v262 = vpop.permute.xlu0 %261
  %v263 = vsel %vm239, %v256, %v258
  %v264 = vsel %vm239, %v258, %v260
  %v265 = vsel %vm239, %v260, %v262
  %269 = vst [vmem:[#allocation2 + $0x78] sm:$0xf0] %v263
  %270 = vst [vmem:[#allocation2 + $0x80] sm:$0xf0] %v264
  %271 = vst [vmem:[#allocation2 + $0x88] sm:$0xf0] %v265
  %v272 = vld [vmem:[%s0] sm:$0xff]
  %v273 = vld [vmem:[%s0 + $0x8] sm:$0xff]
  %v276 = vcombine.high %v272, %v272
  %v277 = vcombine.high %v273, %v273
  %278 = vrot.lane.b32.xlu0 %v272, 92
  %v279 = vpop.permute.xlu0 %278
  %280 = vrot.lane.b32.xlu0 %v276, 92
  %v281 = vpop.permute.xlu0 %280
  %282 = vrot.lane.b32.xlu0 %v273, 92
  %v283 = vpop.permute.xlu0 %282
  %284 = vrot.lane.b32.xlu0 %v277, 92
  %v285 = vpop.permute.xlu0 %284
  %vm286 = vcmask 752640
  %v287 = vsel %vm286, %v279, %v281
  %v288 = vsel %vm286, %v281, %v283
  %v289 = vsel %vm286, %v283, %v285
  %293 = vst [vmem:[#allocation2 + $0x90] sm:$0xf] %v287
  %294 = vst [vmem:[#allocation2 + $0x98] sm:$0xf] %v288
  %295 = vst [vmem:[#allocation2 + $0xa0] sm:$0xf] %v289
  %v296 = vld [vmem:[%s28] sm:$0xff]
  %v297 = vld [vmem:[%s28 + $0x8] sm:$0xff]
  %v300 = vcombine.high %v296, %v296
  %v301 = vcombine.high %v297, %v297
  %302 = vrot.lane.b32.xlu0 %v296, 92
  %v303 = vpop.permute.xlu0 %302
  %304 = vrot.lane.b32.xlu0 %v300, 92
  %v305 = vpop.permute.xlu0 %304
  %306 = vrot.lane.b32.xlu0 %v297, 92
  %v307 = vpop.permute.xlu0 %306
  %308 = vrot.lane.b32.xlu0 %v301, 92
  %v309 = vpop.permute.xlu0 %308
  %v310 = vsel %vm286, %v303, %v305
  %v311 = vsel %vm286, %v305, %v307
  %v312 = vsel %vm286, %v307, %v309
  %316 = vst [vmem:[#allocation2 + $0xa8] sm:$0xf] %v310
  %317 = vst [vmem:[#allocation2 + $0xb0] sm:$0xf] %v311
  %318 = vst [vmem:[#allocation2 + $0xb8] sm:$0xf] %v312
  %v319 = vld [vmem:[%s0] sm:$0xff]
  %v320 = vld [vmem:[%s0 + $0x8] sm:$0xff]
  %v323 = vcombine.low %v319, %v319
  %v324 = vcombine.low %v320, %v320
  %325 = vrot.lane.b32.xlu0 %v323, 91
  %v326 = vpop.permute.xlu0 %325
  %327 = vrot.lane.b32.xlu0 %v319, 91
  %v328 = vpop.permute.xlu0 %327
  %329 = vrot.lane.b32.xlu0 %v324, 91
  %v330 = vpop.permute.xlu0 %329
  %331 = vrot.lane.b32.xlu0 %v320, 91
  %v332 = vpop.permute.xlu0 %331
  %vm333 = vcmask 744448
  %v334 = vsel %vm333, %v326, %v328
  %v335 = vsel %vm333, %v328, %v330
  %v336 = vsel %vm333, %v330, %v332
  %340 = vst [vmem:[#allocation2 + $0x90] sm:$0xf0] %v334
  %341 = vst [vmem:[#allocation2 + $0x98] sm:$0xf0] %v335
  %342 = vst [vmem:[#allocation2 + $0xa0] sm:$0xf0] %v336
  %v343 = vld [vmem:[%s28] sm:$0xff]
  %v344 = vld [vmem:[%s28 + $0x8] sm:$0xff]
  %v347 = vcombine.low %v343, %v343
  %v348 = vcombine.low %v344, %v344
  %349 = vrot.lane.b32.xlu0 %v347, 91
  %v350 = vpop.permute.xlu0 %349
  %351 = vrot.lane.b32.xlu0 %v343, 91
  %v352 = vpop.permute.xlu0 %351
  %353 = vrot.lane.b32.xlu0 %v348, 91
  %v354 = vpop.permute.xlu0 %353
  %355 = vrot.lane.b32.xlu0 %v344, 91
  %v356 = vpop.permute.xlu0 %355
  %v357 = vsel %vm333, %v350, %v352
  %v358 = vsel %vm333, %v352, %v354
  %v359 = vsel %vm333, %v354, %v356
  %363 = vst [vmem:[#allocation2 + $0xa8] sm:$0xf0] %v357
  %364 = vst [vmem:[#allocation2 + $0xb0] sm:$0xf0] %v358
  %365 = vst [vmem:[#allocation2 + $0xb8] sm:$0xf0] %v359
  %v366 = vld [vmem:[%s0] sm:$0xff]
  %v367 = vld [vmem:[%s0 + $0x8] sm:$0xff]
  %v370 = vcombine.high %v366, %v366
  %v371 = vcombine.high %v367, %v367
  %372 = vrot.lane.b32.xlu0 %v366, 90
  %v373 = vpop.permute.xlu0 %372
  %374 = vrot.lane.b32.xlu0 %v370, 90
  %v375 = vpop.permute.xlu0 %374
  %376 = vrot.lane.b32.xlu0 %v367, 90
  %v377 = vpop.permute.xlu0 %376
  %378 = vrot.lane.b32.xlu0 %v371, 90
  %v379 = vpop.permute.xlu0 %378
  %vm380 = vcmask 736256
  %v381 = vsel %vm380, %v373, %v375
  %v382 = vsel %vm380, %v375, %v377
  %v383 = vsel %vm380, %v377, %v379
  %387 = vst [vmem:[#allocation2 + $0xc0] sm:$0xf] %v381
  %388 = vst [vmem:[#allocation2 + $0xc8] sm:$0xf] %v382
  %389 = vst [vmem:[#allocation2 + $0xd0] sm:$0xf] %v383
  %v390 = vld [vmem:[%s28] sm:$0xff]
  %v391 = vld [vmem:[%s28 + $0x8] sm:$0xff]
  %v394 = vcombine.high %v390, %v390
  %v395 = vcombine.high %v391, %v391
  %396 = vrot.lane.b32.xlu0 %v390, 90
  %v397 = vpop.permute.xlu0 %396
  %398 = vrot.lane.b32.xlu0 %v394, 90
  %v399 = vpop.permute.xlu0 %398
  %400 = vrot.lane.b32.xlu0 %v391, 90
  %v401 = vpop.permute.xlu0 %400
  %402 = vrot.lane.b32.xlu0 %v395, 90
  %v403 = vpop.permute.xlu0 %402
  %v404 = vsel %vm380, %v397, %v399
  %v405 = vsel %vm380, %v399, %v401
  %v406 = vsel %vm380, %v401, %v403
  %410 = vst [vmem:[#allocation2 + $0xd8] sm:$0xf] %v404
  %411 = vst [vmem:[#allocation2 + $0xe0] sm:$0xf] %v405
  %412 = vst [vmem:[#allocation2 + $0xe8] sm:$0xf] %v406
  %v413 = vld [vmem:[%s1] sm:$0xff]
  %v414 = vld [vmem:[#allocation2] sm:$0xff]
  %v415 = vld [vmem:[#allocation2 + $0x8] sm:$0xff]
  %v416 = vld [vmem:[#allocation2 + $0x10] sm:$0xff]
  %v417 = vld [vmem:[#allocation2 + $0x18] sm:$0xff]
  %v418 = vld [vmem:[#allocation2 + $0x20] sm:$0xff]
  %v419 = vld [vmem:[#allocation2 + $0x28] sm:$0xff]
  %v420 = vld [vmem:[#allocation2 + $0x30] sm:$0xff]
  %v421 = vld [vmem:[#allocation2 + $0x38] sm:$0xff]
  %v422 = vld [vmem:[#allocation2 + $0x40] sm:$0xff]
  %v423 = vld [vmem:[#allocation2 + $0x48] sm:$0xff]
  %v424 = vld [vmem:[#allocation2 + $0x50] sm:$0xff]
  %v425 = vld [vmem:[#allocation2 + $0x58] sm:$0xff]
  %v426 = vld [vmem:[#allocation2 + $0x60] sm:$0xff]
  %v427 = vld [vmem:[#allocation2 + $0x68] sm:$0xff]
  %v428 = vld [vmem:[#allocation2 + $0x70] sm:$0xff]
  %v429 = vld [vmem:[#allocation2 + $0x78] sm:$0xff]
  %v430 = vld [vmem:[#allocation2 + $0x80] sm:$0xff]
  %v431 = vld [vmem:[#allocation2 + $0x88] sm:$0xff]
  %v432 = vld [vmem:[#allocation2 + $0x90] sm:$0xff]
  %v433 = vld [vmem:[#allocation2 + $0x98] sm:$0xff]
  %v434 = vld [vmem:[#allocation2 + $0xa0] sm:$0xff]
  %v435 = vld [vmem:[#allocation2 + $0xa8] sm:$0xff]
  %v436 = vld [vmem:[#allocation2 + $0xb0] sm:$0xff]
  %v437 = vld [vmem:[#allocation2 + $0xb8] sm:$0xff]
  %v438 = vld [vmem:[#allocation2 + $0xc0] sm:$0xf]
  %v439 = vld [vmem:[#allocation2 + $0xc8] sm:$0xf]
  %v440 = vld [vmem:[#allocation2 + $0xd0] sm:$0xf]
  %v441 = vld [vmem:[#allocation2 + $0xd8] sm:$0xf]
  %v442 = vld [vmem:[#allocation2 + $0xe0] sm:$0xf]
  %v443 = vld [vmem:[#allocation2 + $0xe8] sm:$0xf]
  %vm444 = vcmask 293888
  %v446 = vsel %vm444, %v413, 0
  %vm448 = vcmask 1043456
  %v450 = vsel %vm448, %v438, 0
  %v453 = vsel %vm448, %v439, 0
  %v456 = vsel %vm448, %v440, 0
  %v459 = vsel %vm448, %v441, 0
  %v462 = vsel %vm448, %v442, 0
  %v465 = vsel %vm448, %v443, 0
  %467 = vmatprep.subr.mxu0 %v415
  %468 = vmatpush1.msra.mxu0 %v414
  %469 = vmatprep.subr.mxu0 %v421
  %470 = vmatpush1.msra.mxu0 %v420
  %471 = vmatprep.subr.mxu0 %v427
  %472 = vmatpush1.msra.mxu0 %v426
  %473 = vmatprep.subr.mxu0 %v433
  %474 = vmatpush1.msra.mxu0 %v432
  %475 = vmatprep.subr.mxu0 %v453
  %476 = vmatpush1.msra.mxu0 %v450
  %477 = vmatprep.subr.mxu0 0.0
  %478 = vmatpush1.msra.mxu0 0.0
  %479 = vmatprep.subr.mxu0 0.0
  %480 = vmatpush1.msra.mxu0 0.0
  %481 = vmatprep.subr.mxu0 0.0
  %482 = vmatpush1.msra.mxu0 0.0
  %483 = vmatprep.subr.mxu0 0.0
  %484 = vmatpush1.msra.mxu0 0.0
  %485 = vmatprep.subr.mxu0 0.0
  %486 = vmatpush1.msra.mxu0 0.0
  %487 = vmatprep.subr.mxu0 0.0
  %488 = vmatpush1.msra.mxu0 0.0
  %489 = vmatprep.subr.mxu0 0.0
  %490 = vmatpush1.msra.mxu0 0.0
  %491 = vmatprep.subr.mxu0 0.0
  %492 = vmatpush1.msra.mxu0 0.0
  %493 = vmatprep.subr.mxu0 0.0
  %494 = vmatpush1.msra.mxu0 0.0
  %495 = vmatprep.subr.mxu0 0.0
  %496 = vmatpush1.msra.mxu0 0.0
  %497 = vmatprep.subr.mxu0 0.0
  %498 = vmatpush1.msra.mxu0 0.0
  %499 = vmatprep.subr.mxu0 0.0
  %500 = vmatpush1.msra.mxu0 0.0
  %501 = vmatprep.subr.mxu0 0.0
  %502 = vmatpush1.msra.mxu0 0.0
  %503 = vmatprep.subr.mxu0 0.0
  %504 = vmatpush1.msra.mxu0 0.0
  %505 = vmatprep.subr.mxu0 0.0
  %506 = vmatpush1.msra.mxu0 0.0
  %507 = vmatprep.subr.mxu0 0.0
  %508 = vmatpush1.msra.mxu0 0.0
  %509 = vmatprep.subr.mxu0 0.0
  %510 = vmatpush1.msra.mxu0 0.0
  %511 = vmatprep.subr.mxu0 0.0
  %512 = vmatpush1.msra.mxu0 0.0
  %513 = vmatprep.subr.mxu0 0.0
  %514 = vmatpush1.msra.mxu0 0.0
  %515 = vmatprep.subr.mxu0 0.0
  %516 = vmatpush1.msra.mxu0 0.0
  %517 = vmatprep.subr.mxu0 0.0
  %518 = vmatpush1.msra.mxu0 0.0
  %519 = vmatprep.subr.mxu0 0.0
  %520 = vmatpush1.msra.mxu0 0.0
  %521 = vmatprep.subr.mxu0 0.0
  %522 = vmatpush1.msra.mxu0 0.0
  %523 = vmatprep.subr.mxu0 0.0
  %524 = vmatpush1.msra.mxu0 0.0
  %525 = vmatprep.subr.mxu0 0.0
  %526 = vmatpush1.msra.mxu0 0.0
  %527 = vmatprep.subr.mxu0 0.0
  %528 = vmatpush1.msra.mxu0 0.0
  %529 = vmatprep.subr.mxu0 0.0
  %530 = vmatpush1.msra.mxu0 0.0
  %531 = vmatprep.mubr.f32.mxu0 0.0
  %532 = vmatmul.mubr.f32.gmra.mrb[0].mxu0 %v446
  %v533 = vpop.f32.mrb[0].mxu0
  %v534 = vadd.f32 0.0, %v533
  %v535 = vpop.f32.mrb[0].mxu0
  %v536 = vadd.f32 0.0, %v535
  %537 = vdwg.mxu0
  %538 = vmatprep.subr.mxu0 %v417
  %539 = vmatpush1.msra.mxu0 %v416
  %540 = vmatprep.subr.mxu0 %v423
  %541 = vmatpush1.msra.mxu0 %v422
  %542 = vmatprep.subr.mxu0 %v429
  %543 = vmatpush1.msra.mxu0 %v428
  %544 = vmatprep.subr.mxu0 %v435
  %545 = vmatpush1.msra.mxu0 %v434
  %546 = vmatprep.subr.mxu0 %v459
  %547 = vmatpush1.msra.mxu0 %v456
  %548 = vmatprep.subr.mxu0 0.0
  %549 = vmatpush1.msra.mxu0 0.0
  %550 = vmatprep.subr.mxu0 0.0
  %551 = vmatpush1.msra.mxu0 0.0
  %552 = vmatprep.subr.mxu0 0.0
  %553 = vmatpush1.msra.mxu0 0.0
  %554 = vmatprep.subr.mxu0 0.0
  %555 = vmatpush1.msra.mxu0 0.0
  %556 = vmatprep.subr.mxu0 0.0
  %557 = vmatpush1.msra.mxu0 0.0
  %558 = vmatprep.subr.mxu0 0.0
  %559 = vmatpush1.msra.mxu0 0.0
  %560 = vmatprep.subr.mxu0 0.0
  %561 = vmatpush1.msra.mxu0 0.0
  %562 = vmatprep.subr.mxu0 0.0
  %563 = vmatpush1.msra.mxu0 0.0
  %564 = vmatprep.subr.mxu0 0.0
  %565 = vmatpush1.msra.mxu0 0.0
  %566 = vmatprep.subr.mxu0 0.0
  %567 = vmatpush1.msra.mxu0 0.0
  %568 = vmatprep.subr.mxu0 0.0
  %569 = vmatpush1.msra.mxu0 0.0
  %570 = vmatprep.subr.mxu0 0.0
  %571 = vmatpush1.msra.mxu0 0.0
  %572 = vmatprep.subr.mxu0 0.0
  %573 = vmatpush1.msra.mxu0 0.0
  %574 = vmatprep.subr.mxu0 0.0
  %575 = vmatpush1.msra.mxu0 0.0
  %576 = vmatprep.subr.mxu0 0.0
  %577 = vmatpush1.msra.mxu0 0.0
  %578 = vmatprep.subr.mxu0 0.0
  %579 = vmatpush1.msra.mxu0 0.0
  %580 = vmatprep.subr.mxu0 0.0
  %581 = vmatpush1.msra.mxu0 0.0
  %582 = vmatprep.subr.mxu0 0.0
  %583 = vmatpush1.msra.mxu0 0.0
  %584 = vmatprep.subr.mxu0 0.0
  %585 = vmatpush1.msra.mxu0 0.0
  %586 = vmatprep.subr.mxu0 0.0
  %587 = vmatpush1.msra.mxu0 0.0
  %588 = vmatprep.subr.mxu0 0.0
  %589 = vmatpush1.msra.mxu0 0.0
  %590 = vmatprep.subr.mxu0 0.0
  %591 = vmatpush1.msra.mxu0 0.0
  %592 = vmatprep.subr.mxu0 0.0
  %593 = vmatpush1.msra.mxu0 0.0
  %594 = vmatprep.subr.mxu0 0.0
  %595 = vmatpush1.msra.mxu0 0.0
  %596 = vmatprep.subr.mxu0 0.0
  %597 = vmatpush1.msra.mxu0 0.0
  %598 = vmatprep.subr.mxu0 0.0
  %599 = vmatpush1.msra.mxu0 0.0
  %600 = vmatprep.subr.mxu0 0.0
  %601 = vmatpush1.msra.mxu0 0.0
  %602 = vmatprep.mubr.f32.mxu0 0.0
  %603 = vmatmul.mubr.f32.gmra.mrb[0].mxu0 %v446
  %v604 = vpop.f32.mrb[0].mxu0
  %v605 = vadd.f32 0.0, %v604
  %v606 = vpop.f32.mrb[0].mxu0
  %v607 = vadd.f32 0.0, %v606
  %608 = vdwg.mxu0
  %609 = vmatprep.subr.mxu0 %v419
  %610 = vmatpush1.msra.mxu0 %v418
  %611 = vmatprep.subr.mxu0 %v425
  %612 = vmatpush1.msra.mxu0 %v424
  %613 = vmatprep.subr.mxu0 %v431
  %614 = vmatpush1.msra.mxu0 %v430
  %615 = vmatprep.subr.mxu0 %v437
  %616 = vmatpush1.msra.mxu0 %v436
  %617 = vmatprep.subr.mxu0 %v465
  %618 = vmatpush1.msra.mxu0 %v462
  %619 = vmatprep.subr.mxu0 0.0
  %620 = vmatpush1.msra.mxu0 0.0
  %621 = vmatprep.subr.mxu0 0.0
  %622 = vmatpush1.msra.mxu0 0.0
  %623 = vmatprep.subr.mxu0 0.0
  %624 = vmatpush1.msra.mxu0 0.0
  %625 = vmatprep.subr.mxu0 0.0
  %626 = vmatpush1.msra.mxu0 0.0
  %627 = vmatprep.subr.mxu0 0.0
  %628 = vmatpush1.msra.mxu0 0.0
  %629 = vmatprep.subr.mxu0 0.0
  %630 = vmatpush1.msra.mxu0 0.0
  %631 = vmatprep.subr.mxu0 0.0
  %632 = vmatpush1.msra.mxu0 0.0
  %633 = vmatprep.subr.mxu0 0.0
  %634 = vmatpush1.msra.mxu0 0.0
  %635 = vmatprep.subr.mxu0 0.0
  %636 = vmatpush1.msra.mxu0 0.0
  %637 = vmatprep.subr.mxu0 0.0
  %638 = vmatpush1.msra.mxu0 0.0
  %639 = vmatprep.subr.mxu0 0.0
  %640 = vmatpush1.msra.mxu0 0.0
  %641 = vmatprep.subr.mxu0 0.0
  %642 = vmatpush1.msra.mxu0 0.0
  %643 = vmatprep.subr.mxu0 0.0
  %644 = vmatpush1.msra.mxu0 0.0
  %645 = vmatprep.subr.mxu0 0.0
  %646 = vmatpush1.msra.mxu0 0.0
  %647 = vmatprep.subr.mxu0 0.0
  %648 = vmatpush1.msra.mxu0 0.0
  %649 = vmatprep.subr.mxu0 0.0
  %650 = vmatpush1.msra.mxu0 0.0
  %651 = vmatprep.subr.mxu0 0.0
  %652 = vmatpush1.msra.mxu0 0.0
  %653 = vmatprep.subr.mxu0 0.0
  %654 = vmatpush1.msra.mxu0 0.0
  %655 = vmatprep.subr.mxu0 0.0
  %656 = vmatpush1.msra.mxu0 0.0
  %657 = vmatprep.subr.mxu0 0.0
  %658 = vmatpush1.msra.mxu0 0.0
  %659 = vmatprep.subr.mxu0 0.0
  %660 = vmatpush1.msra.mxu0 0.0
  %661 = vmatprep.subr.mxu0 0.0
  %662 = vmatpush1.msra.mxu0 0.0
  %663 = vmatprep.subr.mxu0 0.0
  %664 = vmatpush1.msra.mxu0 0.0
  %665 = vmatprep.subr.mxu0 0.0
  %666 = vmatpush1.msra.mxu0 0.0
  %667 = vmatprep.subr.mxu0 0.0
  %668 = vmatpush1.msra.mxu0 0.0
  %669 = vmatprep.subr.mxu0 0.0
  %670 = vmatpush1.msra.mxu0 0.0
  %671 = vmatprep.subr.mxu0 0.0
  %672 = vmatpush1.msra.mxu0 0.0
  %673 = vmatprep.mubr.f32.mxu0 0.0
  %674 = vmatmul.mubr.f32.gmra.mrb[0].mxu0 %v446
  %v675 = vpop.f32.mrb[0].mxu0
  %v676 = vadd.f32 0.0, %v675
  %v677 = vpop.f32.mrb[0].mxu0
  %v678 = vadd.f32 0.0, %v677
  %679 = vdwg.mxu0
  %v680 = vlaneseq
  %v681 = vand.u32 %v680, 127
  %v682 = vadd.s32 %v681, 128
  %v683 = vadd.s32 %v681, 256
  %v684 = vadd.s32 %v681, 384
  %v685 = vadd.s32 %v681, 512
  %v686 = vadd.s32 %v681, 640
  %vm687 = vcmp.lt.s32.totalorder %v681, 0
  %v688 = vsub.s32 0, %v681
  %v689 = vsel %vm687, %v688, %v681
  %v690 = vmul.u32.u64.compose %v689, 2863311531
  %v691 = vextract.low.u32 %v690
  %v692 = vextract.high.u32 %v690
  %v693 = vshrl.u32 %v692, 8
  %v694 = vmul.u32 %v693, 384
  %v695 = vsub.s32 %v689, %v694
  %v696 = vsub.s32 0, %v695
  %v697 = vsel %vm687, %v696, %v695
  %vm698 = vcmp.lt.s32.totalorder %v682, 0
  %v699 = vsub.s32 0, %v682
  %v700 = vsel %vm698, %v699, %v682
  %v701 = vmul.u32.u64.compose %v700, 2863311531
  %v702 = vextract.low.u32 %v701
  %v703 = vextract.high.u32 %v701
  %v704 = vshrl.u32 %v703, 8
  %v705 = vmul.u32 %v704, 384
  %v706 = vsub.s32 %v700, %v705
  %v707 = vsub.s32 0, %v706
  %v708 = vsel %vm698, %v707, %v706
  %vm709 = vcmp.lt.s32.totalorder %v683, 0
  %v710 = vsub.s32 0, %v683
  %v711 = vsel %vm709, %v710, %v683
  %v712 = vmul.u32.u64.compose %v711, 2863311531
  %v713 = vextract.low.u32 %v712
  %v714 = vextract.high.u32 %v712
  %v715 = vshrl.u32 %v714, 8
  %v716 = vmul.u32 %v715, 384
  %v717 = vsub.s32 %v711, %v716
  %v718 = vsub.s32 0, %v717
  %v719 = vsel %vm709, %v718, %v717
  %vm720 = vcmp.lt.s32.totalorder %v684, 0
  %v721 = vsub.s32 0, %v684
  %v722 = vsel %vm720, %v721, %v684
  %v723 = vmul.u32.u64.compose %v722, 2863311531
  %v724 = vextract.low.u32 %v723
  %v725 = vextract.high.u32 %v723
  %v726 = vshrl.u32 %v725, 8
  %v727 = vmul.u32 %v726, 384
  %v728 = vsub.s32 %v722, %v727
  %v729 = vsub.s32 0, %v728
  %v730 = vsel %vm720, %v729, %v728
  %vm731 = vcmp.lt.s32.totalorder %v685, 0
  %v732 = vsub.s32 0, %v685
  %v733 = vsel %vm731, %v732, %v685
  %v734 = vmul.u32.u64.compose %v733, 2863311531
  %v735 = vextract.low.u32 %v734
  %v736 = vextract.high.u32 %v734
  %v737 = vshrl.u32 %v736, 8
  %v738 = vmul.u32 %v737, 384
  %v739 = vsub.s32 %v733, %v738
  %v740 = vsub.s32 0, %v739
  %v741 = vsel %vm731, %v740, %v739
  %vm742 = vcmp.lt.s32.totalorder %v686, 0
  %v743 = vsub.s32 0, %v686
  %v744 = vsel %vm742, %v743, %v686
  %v745 = vmul.u32.u64.compose %v744, 2863311531
  %v746 = vextract.low.u32 %v745
  %v747 = vextract.high.u32 %v745
  %v748 = vshrl.u32 %v747, 8
  %v749 = vmul.u32 %v748, 384
  %v750 = vsub.s32 %v744, %v749
  %v751 = vsub.s32 0, %v750
  %v752 = vsel %vm742, %v751, %v750
  %vm753 = vcmp.ne.s32.totalorder %v697, 0
  %vm754 = vcmp.ne.s32.totalorder %v708, 0
  %vm755 = vcmp.ne.s32.totalorder %v719, 0
  %vm756 = vcmp.ne.s32.totalorder %v730, 0
  %vm757 = vcmp.ne.s32.totalorder %v741, 0
  %vm758 = vcmp.ne.s32.totalorder %v752, 0
  %vm759 = vcmp.lt.s32.totalorder %v697, 0
  %vm760 = vcmp.lt.s32.totalorder %v708, 0
  %vm761 = vcmp.lt.s32.totalorder %v719, 0
  %vm762 = vcmp.lt.s32.totalorder %v730, 0
  %vm763 = vcmp.lt.s32.totalorder %v741, 0
  %vm764 = vcmp.lt.s32.totalorder %v752, 0
  %vm765 = vmand %vm759, %vm753
  %vm766 = vmand %vm760, %vm754
  %vm767 = vmand %vm761, %vm755
  %vm768 = vmand %vm762, %vm756
  %vm769 = vmand %vm763, %vm757
  %vm770 = vmand %vm764, %vm758
  %v771 = vadd.s32 %v697, 384
  %v772 = vadd.s32 %v708, 384
  %v773 = vadd.s32 %v719, 384
  %v774 = vadd.s32 %v730, 384
  %v775 = vadd.s32 %v741, 384
  %v776 = vadd.s32 %v752, 384
  %v777 = vsel %vm765, %v771, %v697
  %v778 = vsel %vm766, %v772, %v708
  %v779 = vsel %vm767, %v773, %v719
  %v780 = vsel %vm768, %v774, %v730
  %v781 = vsel %vm769, %v775, %v741
  %v782 = vsel %vm770, %v776, %v752
  %vm783 = vcmp.lt.s32.totalorder %v777, 288
  %vm784 = vcmp.lt.s32.totalorder %v778, 288
  %vm785 = vcmp.lt.s32.totalorder %v779, 288
  %vm786 = vcmp.lt.s32.totalorder %v780, 288
  %vm787 = vcmp.lt.s32.totalorder %v781, 288
  %vm788 = vcmp.lt.s32.totalorder %v782, 288
  %vm789 = vcmp.lt.s32.totalorder %v777, 0
  %v790 = vsub.s32 0, %v777
  %v791 = vsel %vm789, %v790, %v777
  %v792 = vmul.u32.u64.compose %v791, 3817748708
  %v793 = vextract.low.u32 %v792
  %v794 = vextract.high.u32 %v792
  %v795 = vshrl.u32 %v794, 4
  %v796 = vmul.u32 %v795, 18
  %v797 = vsub.s32 %v791, %v796
  %v798 = vsub.s32 0, %v797
  %v799 = vsel %vm789, %v798, %v797
  %vm800 = vcmp.lt.s32.totalorder %v778, 0
  %v801 = vsub.s32 0, %v778
  %v802 = vsel %vm800, %v801, %v778
  %v803 = vmul.u32.u64.compose %v802, 3817748708
  %v804 = vextract.low.u32 %v803
  %v805 = vextract.high.u32 %v803
  %v806 = vshrl.u32 %v805, 4
  %v807 = vmul.u32 %v806, 18
  %v808 = vsub.s32 %v802, %v807
  %v809 = vsub.s32 0, %v808
  %v810 = vsel %vm800, %v809, %v808
  %vm811 = vcmp.lt.s32.totalorder %v779, 0
  %v812 = vsub.s32 0, %v779
  %v813 = vsel %vm811, %v812, %v779
  %v814 = vmul.u32.u64.compose %v813, 3817748708
  %v815 = vextract.low.u32 %v814
  %v816 = vextract.high.u32 %v814
  %v817 = vshrl.u32 %v816, 4
  %v818 = vmul.u32 %v817, 18
  %v819 = vsub.s32 %v813, %v818
  %v820 = vsub.s32 0, %v819
  %v821 = vsel %vm811, %v820, %v819
  %vm822 = vcmp.lt.s32.totalorder %v780, 0
  %v823 = vsub.s32 0, %v780
  %v824 = vsel %vm822, %v823, %v780
  %v825 = vmul.u32.u64.compose %v824, 3817748708
  %v826 = vextract.low.u32 %v825
  %v827 = vextract.high.u32 %v825
  %v828 = vshrl.u32 %v827, 4
  %v829 = vmul.u32 %v828, 18
  %v830 = vsub.s32 %v824, %v829
  %v831 = vsub.s32 0, %v830
  %v832 = vsel %vm822, %v831, %v830
  %vm833 = vcmp.lt.s32.totalorder %v781, 0
  %v834 = vsub.s32 0, %v781
  %v835 = vsel %vm833, %v834, %v781
  %v836 = vmul.u32.u64.compose %v835, 3817748708
  %v837 = vextract.low.u32 %v836
  %v838 = vextract.high.u32 %v836
  %v839 = vshrl.u32 %v838, 4
  %v840 = vmul.u32 %v839, 18
  %v841 = vsub.s32 %v835, %v840
  %v842 = vsub.s32 0, %v841
  %v843 = vsel %vm833, %v842, %v841
  %vm844 = vcmp.lt.s32.totalorder %v782, 0
  %v845 = vsub.s32 0, %v782
  %v846 = vsel %vm844, %v845, %v782
  %v847 = vmul.u32.u64.compose %v846, 3817748708
  %v848 = vextract.low.u32 %v847
  %v849 = vextract.high.u32 %v847
  %v850 = vshrl.u32 %v849, 4
  %v851 = vmul.u32 %v850, 18
  %v852 = vsub.s32 %v846, %v851
  %v853 = vsub.s32 0, %v852
  %v854 = vsel %vm844, %v853, %v852
  %vm855 = vcmp.ne.s32.totalorder %v799, 0
  %vm856 = vcmp.ne.s32.totalorder %v810, 0
  %vm857 = vcmp.ne.s32.totalorder %v821, 0
  %vm858 = vcmp.ne.s32.totalorder %v832, 0
  %vm859 = vcmp.ne.s32.totalorder %v843, 0
  %vm860 = vcmp.ne.s32.totalorder %v854, 0
  %vm861 = vcmp.lt.s32.totalorder %v799, 0
  %vm862 = vcmp.lt.s32.totalorder %v810, 0
  %vm863 = vcmp.lt.s32.totalorder %v821, 0
  %vm864 = vcmp.lt.s32.totalorder %v832, 0
  %vm865 = vcmp.lt.s32.totalorder %v843, 0
  %vm866 = vcmp.lt.s32.totalorder %v854, 0
  %vm867 = vmand %vm861, %vm855
  %vm868 = vmand %vm862, %vm856
  %vm869 = vmand %vm863, %vm857
  %vm870 = vmand %vm864, %vm858
  %vm871 = vmand %vm865, %vm859
  %vm872 = vmand %vm866, %vm860
  %v873 = vadd.s32 %v799, 18
  %v874 = vadd.s32 %v810, 18
  %v875 = vadd.s32 %v821, 18
  %v876 = vadd.s32 %v832, 18
  %v877 = vadd.s32 %v843, 18
  %v878 = vadd.s32 %v854, 18
  %v879 = vsel %vm867, %v873, %v799
  %v880 = vsel %vm868, %v874, %v810
  %v881 = vsel %vm869, %v875, %v821
  %v882 = vsel %vm870, %v876, %v832
  %v883 = vsel %vm871, %v877, %v843
  %v884 = vsel %vm872, %v878, %v854
  %vm885 = vcmp.lt.s32.totalorder %v879, 16
  %vm886 = vcmp.lt.s32.totalorder %v880, 16
  %vm887 = vcmp.lt.s32.totalorder %v881, 16
  %vm888 = vcmp.lt.s32.totalorder %v882, 16
  %vm889 = vcmp.lt.s32.totalorder %v883, 16
  %vm890 = vcmp.lt.s32.totalorder %v884, 16
  %vm891 = vmand %vm783, %vm885
  %vm892 = vmand %vm784, %vm886
  %vm893 = vmand %vm785, %vm887
  %vm894 = vmand %vm786, %vm888
  %vm895 = vmand %vm787, %vm889
  %vm896 = vmand %vm788, %vm890
  %v897 = vsel %vm891, 1, 0
  %v898 = vsel %vm892, 1, 0
  %v899 = vsel %vm893, 1, 0
  %v900 = vsel %vm894, 1, 0
  %v901 = vsel %vm895, 1, 0
  %v902 = vsel %vm896, 1, 0
  %v903 = vcvt.s32.f32 %v897
  %v904 = vcvt.s32.f32 %v898
  %v905 = vcvt.s32.f32 %v899
  %v906 = vcvt.s32.f32 %v900
  %v907 = vcvt.s32.f32 %v901
  %v908 = vcvt.s32.f32 %v902
  %v909 = vmul.f32 %v534, %v903
  %v910 = vmul.f32 %v536, %v904
  %v911 = vmul.f32 %v605, %v905
  %v912 = vmul.f32 %v607, %v906
  %v913 = vmul.f32 %v676, %v907
  %v914 = vmul.f32 %v678, %v908
  %v915 = vadd.f32 %v909, %v910
  %v916 = vadd.f32 %v915, %v911
  %v917 = vadd.f32 %v916, %v912
  %v918 = vadd.f32 %v917, %v913
  %v919 = vadd.f32 %v918, %v914
  %920 = vadd.xlane.f32.xlu0 %v919
  %v921 = vpop.xlane.xlu0 %920
  %v922 = vrcp.pop 512.0
  %v923 = vmul.f32 %v921, %v922
  %v924 = vmul.f32 %v909, %v909
  %v925 = vmul.f32 %v910, %v910
  %v926 = vmul.f32 %v911, %v911
  %v927 = vmul.f32 %v912, %v912
  %v928 = vmul.f32 %v913, %v913
  %v929 = vmul.f32 %v914, %v914
  %v930 = vadd.f32 %v924, %v925
  %v931 = vadd.f32 %v930, %v926
  %v932 = vadd.f32 %v931, %v927
  %v933 = vadd.f32 %v932, %v928
  %v934 = vadd.f32 %v933, %v929
  %935 = vadd.xlane.f32.xlu0 %v934
  %v936 = vpop.xlane.xlu0 %935
  %v937 = vmul.f32 %v936, %v922
  %v938 = vmul.f32 %v923, %v923
  %v939 = vsub.f32 %v937, %v938
  %v940 = vadd.f32 %v939, 1e-05
  %v941 = vrsqrt.pop %v940
  %v942 = vld [vmem:[%s3] sm:$0xff]
  %v943 = vld [vmem:[%s3 + $0x8] sm:$0xff]
  %v944 = vld [vmem:[%s4] sm:$0xff]
  %v945 = vld [vmem:[%s4 + $0x8] sm:$0xff]
  %v946 = vld [vmem:[%s2] sm:$0x3]
  %v947 = vlaneseq
  %v948 = vshrl.u32 %v947, 7
  %v949 = vsub.s32 0, %v948
  %v950 = vrot.slane %v946, %v949
  %v951 = vmul.f32 %v942, %v950
  %v952 = vmul.f32 %v943, %v950
  %vm953 = vcmask 261120
  %v954 = vsel %vm953, %v951, 0.0
  %955 = vadd.xlane.f32.xlu0 %v954
  %v956 = vpop.xlane.xlu0 %955
  %v957 = vsel %vm953, %v952, 0.0
  %958 = vadd.xlane.f32.xlu0 %v957
  %v959 = vpop.xlane.xlu0 %958
  %v960 = vadd.f32 %v956, %v944
  %v961 = vadd.f32 %v959, %v945
  %vm962 = vcmp.ge.f32.partialorder %v960, 0.0
  %vm963 = vcmp.ge.f32.partialorder %v961, 0.0
  %v964 = vmul.f32 %v960, 0.2
  %v965 = vmul.f32 %v961, 0.2
  %v966 = vsel %vm962, %v960, %v964
  %v967 = vsel %vm963, %v961, %v965
  %v968 = vadd.f32 %v966, 1.0
  %v969 = vmul.f32 %v968, %v941
  %v970 = vmul.f32 %v923, %v969
  %v971 = vsub.f32 %v967, %v970
  %973 = vset.pattern.permute.xlu0 0
  %974 = vperm.xlu0 %973, %v969
  %v975 = vpop.permute.xlu0 %974
  %v977 = vmul.f32 %v534, %v975
  %v978 = vmul.f32 %v536, %v975
  %v979 = vmul.f32 %v605, %v975
  %981 = vset.pattern.permute.xlu0 0
  %982 = vperm.xlu0 %981, %v971
  %v983 = vpop.permute.xlu0 %982
  %v985 = vadd.f32 %v977, %v983
  %v986 = vadd.f32 %v978, %v983
  %v987 = vadd.f32 %v979, %v983
  %v988 = vmax.f32 %v985, 0.0
  %v989 = vmax.f32 %v986, 0.0
  %v990 = vmax.f32 %v987, 0.0
  %991 = vst [vmem:[%s5] sm:$0xff] %v988
  %992 = vst [vmem:[%s5 + $0x8] sm:$0xff] %v989
  %993 = vst [vmem:[%s5 + $0x10] sm:$0xff] %v990
  %v994 = vlaneseq
  %v995 = vshrl.u32 %v994, 7
  %v996 = vsub.s32 1, %v995
  %v997 = vrot.slane %v946, %v996
  %v998 = vmul.f32 %v942, %v997
  %v999 = vmul.f32 %v943, %v997
  %v1000 = vsel %vm953, %v998, 0.0
  %1001 = vadd.xlane.f32.xlu0 %v1000
  %v1002 = vpop.xlane.xlu0 %1001
  %v1003 = vsel %vm953, %v999, 0.0
  %1004 = vadd.xlane.f32.xlu0 %v1003
  %v1005 = vpop.xlane.xlu0 %1004
  %v1006 = vadd.f32 %v1002, %v944
  %v1007 = vadd.f32 %v1005, %v945
  %vm1008 = vcmp.ge.f32.partialorder %v1006, 0.0
  %vm1009 = vcmp.ge.f32.partialorder %v1007, 0.0
  %v1010 = vmul.f32 %v1006, 0.2
  %v1011 = vmul.f32 %v1007, 0.2
  %v1012 = vsel %vm1008, %v1006, %v1010
  %v1013 = vsel %vm1009, %v1007, %v1011
  %v1014 = vadd.f32 %v1012, 1.0
  %v1015 = vmul.f32 %v1014, %v941
  %v1016 = vmul.f32 %v923, %v1015
  %v1017 = vsub.f32 %v1013, %v1016
  %1019 = vset.pattern.permute.xlu0 0
  %1020 = vperm.xlu0 %1019, %v1015
  %v1021 = vpop.permute.xlu0 %1020
  %v1023 = vmul.f32 %v607, %v1021
  %v1024 = vmul.f32 %v676, %v1021
  %v1025 = vmul.f32 %v678, %v1021
  %1027 = vset.pattern.permute.xlu0 0
  %1028 = vperm.xlu0 %1027, %v1017
  %v1029 = vpop.permute.xlu0 %1028
  %v1031 = vadd.f32 %v1023, %v1029
  %v1032 = vadd.f32 %v1024, %v1029
  %v1033 = vadd.f32 %v1025, %v1029
  %v1034 = vmax.f32 %v1031, 0.0
  %v1035 = vmax.f32 %v1032, 0.0
  %v1036 = vmax.f32 %v1033, 0.0
  %1037 = vst [vmem:[%s5 + $0x18] sm:$0xff] %v1034
  %1038 = vst [vmem:[%s5 + $0x20] sm:$0xff] %v1035
  %1039 = vst [vmem:[%s5 + $0x28] sm:$0xff] %v1036
  // Predicated region
  $region22: #{styled_conv_block.1} parent=0 // pred_check
    _
  $region23: #{styled_conv_block.1} parent=0 // pred_check_branch
    %1041 = sbr.rel (0) target = $region25
  $region24: #{styled_conv_block.1} parent=0 // pred_region
    _
  $region25: #{styled_conv_block.1} parent=0 // pred_fallthru
    _
  // Predicated region
  $region26: #{styled_conv_block.1} parent=0 // pred_check
    _
  $region27: #{styled_conv_block.1} parent=0 // pred_check_branch
    %1043 = sbr.rel (0) target = $region29
  $region28: #{styled_conv_block.1} parent=0 // pred_region
    _
  $region29: #{styled_conv_block.1} parent=0 // pred_fallthru
    _

</llo_original>
